<compile_context>
chip_gen: v7x
topology: tpu7x:2x2x1
jax: 0.10.0
libtpu: 0.0.40
codegen_flags: <defaults>
</compile_context>

<pallas_src>
import jax
import jax.numpy as jnp
from jax.experimental import pallas as pl
from jax.experimental.pallas import tpu as pltpu

LANE = 128        # hidden feature lanes (fc1/fc2/fc3 outputs padded to 128)
OUT_LANES = 8     # fc4 output padded to 8 lanes (real output is lane 0)
_DEFAULT_TM = 1024


def _round_up(n, m):
    return ((n + m - 1) // m) * m


def _is_v7x():
    try:
        return "v7" in jax.devices()[0].device_kind.lower()
    except Exception:
        return False


def _pick_tm(B, tm=None):
    if tm is None:
        tm = _DEFAULT_TM
    tm = max(8, min(_round_up(tm, 8), _round_up(B, 8)))
    # Keep >= 2 grid steps when the batch is large enough so v7x's two
    # TensorCores both get work (no effect on v5e/v6e, single TC).
    if B >= 512 and pl.cdiv(B, tm) < 2:
        tm = _round_up(pl.cdiv(_round_up(B, 8), 2), 8)
    return tm


def mlp_kernel(x_ref, w1_ref, b1_ref, w2_ref, b2_ref,
               w3_ref, b3_ref, w4_ref, b4_ref, o_ref):
    # Cast the x tile to the matmul dtype in-register (no HBM-side copy of x).
    x = x_ref[...].astype(w1_ref.dtype)

    h = jnp.dot(x, w1_ref[...], preferred_element_type=jnp.float32)
    h = jnp.maximum(h + b1_ref[...], 0.0)

    h = jnp.dot(h.astype(w2_ref.dtype), w2_ref[...],
                preferred_element_type=jnp.float32)
    h = jnp.maximum(h + b2_ref[...], 0.0)

    h = jnp.dot(h.astype(w3_ref.dtype), w3_ref[...],
                preferred_element_type=jnp.float32)
    h = jnp.maximum(h + b3_ref[...], 0.0)

    h = jnp.dot(h.astype(w4_ref.dtype), w4_ref[...],
                preferred_element_type=jnp.float32)
    o_ref[...] = (h + b4_ref[...]).astype(o_ref.dtype)


def prepare_params(params, compute_dtype=jnp.bfloat16):
    """One-time padding/cast of the weights (hoisted out of the per-call path).

    Weights are stored (in, out). Hidden dims are zero-padded to 128 lanes so the
    fc2/fc3 matmuls are clean MXU shapes; fc4 is padded only to (128, 8) to keep
    the output write small. Biases stay f32 (bias/ReLU run in f32 on the VPU).
    Zero padding is mathematically inert (padded lanes stay exactly 0 thru ReLU).
    """
    def pad_w(w, shape):
        return jnp.zeros(shape, compute_dtype).at[
            :w.shape[0], :w.shape[1]].set(w.astype(compute_dtype))

    def pad_b(b, n):
        return jnp.zeros((1, n), jnp.float32).at[0, :b.shape[0]].set(
            b.astype(jnp.float32))

    w1 = params["w1"].astype(compute_dtype)          # (din, 128) -- no padding
    w2 = pad_w(params["w2"], (LANE, LANE))            # (128, 64) -> (128, 128)
    w3 = pad_w(params["w3"], (LANE, LANE))            # (64, 32)  -> (128, 128)
    w4 = pad_w(params["w4"], (LANE, OUT_LANES))       # (32, 1)   -> (128, 8)
    b1 = pad_b(params["b1"], LANE)
    b2 = pad_b(params["b2"], LANE)
    b3 = pad_b(params["b3"], LANE)
    b4 = pad_b(params["b4"], OUT_LANES)
    return (w1, b1, w2, b2, w3, b3, w4, b4)


def mlp_forward(x, prepared, *, tm=None):
    """x: (B, input_size); prepared: output of prepare_params. Returns (B, 1) f32."""
    B, din = x.shape
    assert prepared[0].shape[0] == din, "prepared params do not match input_size"

    tm = _pick_tm(B, tm)
    grid = (pl.cdiv(B, tm),)

    x_spec = pl.BlockSpec((tm, din), lambda i: (i, 0))          # unpadded x read
    out_spec = pl.BlockSpec((tm, OUT_LANES), lambda i: (i, 0))  # narrow output write
    # Weights / biases: constant index_map -> VMEM-resident across grid steps.
    const_specs = [pl.BlockSpec(a.shape, lambda i: (0, 0)) for a in prepared]

    # --- VMEM budget (generation aware) --------------------------------------
    weights_bytes = sum(int(p.size) * p.dtype.itemsize for p in prepared)
    io_bytes = 2 * (tm * din * x.dtype.itemsize + tm * OUT_LANES * 4)  # dbl-buffered tiles
    interm_bytes = 4 * tm * LANE * 4                                   # f32 intermediates
    needed = 2 * weights_bytes + io_bytes + interm_bytes + (4 << 20)
    cap = (56 << 20) if _is_v7x() else (100 << 20)
    vmem_limit = int(min(max(needed, 32 << 20), cap))

    # --- advisory cost estimate ----------------------------------------------
    flops = 2 * B * (din * 128 + 128 * 64 + 64 * 32 + 32 * 1)
    bytes_accessed = (x.size * x.dtype.itemsize      # real x read
                      + B * OUT_LANES * 4            # output write
                      + weights_bytes)               # weights read once
    cost = pl.CostEstimate(flops=flops, transcendentals=0,
                           bytes_accessed=bytes_accessed)

    out_p = pl.pallas_call(
        mlp_kernel,
        out_shape=jax.ShapeDtypeStruct((B, OUT_LANES), jnp.float32),
        grid=grid,
        in_specs=[x_spec] + const_specs,
        out_specs=out_spec,
        compiler_params=pltpu.CompilerParams(
            dimension_semantics=("parallel",),
            vmem_limit_bytes=vmem_limit),
        cost_estimate=cost,
    )(x, *prepared)

    # Keep only the real output column (lanes 1..7 are zero padding).
    return out_p[:, :1]


def init_params(key, input_size):
    """Deterministic init matching the PyTorch layer shapes (weights stored (in,out))."""
    dims = [(input_size, 128), (128, 64), (64, 32), (32, 1)]
    params = {}
    for i, (dinp, dout) in enumerate(dims, start=1):
        key, kw, kb = jax.random.split(key, 3)
        bound = 1.0 / jnp.sqrt(dinp)
        params[f"w{i}"] = jax.random.uniform(
            kw, (dinp, dout), jnp.float32, minval=-bound, maxval=bound)
        params[f"b{i}"] = jax.random.uniform(
            kb, (dout,), jnp.float32, minval=-bound, maxval=bound)
    return params


def reference_forward(x, params):
    """Plain-JAX reference of the PyTorch forward."""
    h = jnp.maximum(x @ params["w1"] + params["b1"], 0.0)
    h = jnp.maximum(h @ params["w2"] + params["b2"], 0.0)
    h = jnp.maximum(h @ params["w3"] + params["b3"], 0.0)
    return h @ params["w4"] + params["b4"]


if __name__ == "__main__":
    key = jax.random.PRNGKey(0)
    input_size = 32
    batch = 8

    key, kx, kp = jax.random.split(key, 3)
    x = jax.random.normal(kx, (batch, input_size), jnp.float32)
    params = init_params(kp, input_size)
    ref = reference_forward(x, params)

    fwd = jax.jit(mlp_forward)

    # f32 operand path: bit-for-bit-ish vs the f32 reference.
    prep_f32 = prepare_params(params, compute_dtype=jnp.float32)
    out_f32 = jax.block_until_ready(fwd(x, prep_f32))
    assert out_f32.shape == (batch, 1), out_f32.shape
    assert jnp.allclose(out_f32, ref, atol=1e-4, rtol=1e-4), (out_f32, ref)

    # Default bf16 operand path (f32 accumulation): looser, dtype-appropriate tolerance.
    prep_bf16 = prepare_params(params)  # bf16 default
    out_bf16 = jax.block_until_ready(fwd(x, prep_bf16))
    assert out_bf16.shape == (batch, 1), out_bf16.shape
    assert jnp.allclose(out_bf16, ref, atol=1e-1, rtol=1e-1), (out_bf16, ref)

    print("KERNEL_OK")
</pallas_src>

<mosaic_0001>
module attributes {stable_mosaic.version = 11 : i64} {
  func.func @mlp_kernel(%arg0: i32, %arg1: memref<8x32xf32, #tpu.memory_space<vmem>>, %arg2: memref<32x128xf32, #tpu.memory_space<vmem>>, %arg3: memref<1x128xf32, #tpu.memory_space<vmem>>, %arg4: memref<128x128xf32, #tpu.memory_space<vmem>>, %arg5: memref<1x128xf32, #tpu.memory_space<vmem>>, %arg6: memref<128x128xf32, #tpu.memory_space<vmem>>, %arg7: memref<1x128xf32, #tpu.memory_space<vmem>>, %arg8: memref<128x8xf32, #tpu.memory_space<vmem>>, %arg9: memref<1x8xf32, #tpu.memory_space<vmem>>, %arg10: memref<8x8xf32, #tpu.memory_space<vmem>>) attributes {dimension_semantics = [#tpu.dimension_semantics<parallel>], iteration_bounds = array<i64: 1>, scalar_prefetch = 0 : i64, scratch_operands = 0 : i64, tpu.core_type = #tpu.core_type<tc>, window_params = [{transform_indices = @transform_0, window_bounds = array<i64: 8, 32>}, {pipeline_mode = #tpu.pipeline_mode<synchronous>, transform_indices = @transform_1, window_bounds = array<i64: 32, 128>}, {pipeline_mode = #tpu.pipeline_mode<synchronous>, transform_indices = @transform_2, window_bounds = array<i64: 1, 128>}, {pipeline_mode = #tpu.pipeline_mode<synchronous>, transform_indices = @transform_3, window_bounds = array<i64: 128, 128>}, {pipeline_mode = #tpu.pipeline_mode<synchronous>, transform_indices = @transform_4, window_bounds = array<i64: 1, 128>}, {pipeline_mode = #tpu.pipeline_mode<synchronous>, transform_indices = @transform_5, window_bounds = array<i64: 128, 128>}, {pipeline_mode = #tpu.pipeline_mode<synchronous>, transform_indices = @transform_6, window_bounds = array<i64: 1, 128>}, {pipeline_mode = #tpu.pipeline_mode<synchronous>, transform_indices = @transform_7, window_bounds = array<i64: 128, 8>}, {pipeline_mode = #tpu.pipeline_mode<synchronous>, transform_indices = @transform_8, window_bounds = array<i64: 1, 8>}, {transform_indices = @transform_9, window_bounds = array<i64: 8, 8>}]} {
    %c0 = arith.constant 0 : index
    %c0_0 = arith.constant 0 : index
    %0 = vector.load %arg1[%c0, %c0_0] : memref<8x32xf32, #tpu.memory_space<vmem>>, vector<8x32xf32>
    %c0_1 = arith.constant 0 : index
    %c0_2 = arith.constant 0 : index
    %1 = vector.load %arg2[%c0_1, %c0_2] : memref<32x128xf32, #tpu.memory_space<vmem>>, vector<32x128xf32>
    %cst = arith.constant dense<0.000000e+00> : vector<8x128xf32>
    %2 = tpu.matmul %0, %1, %cst {dimension_numbers = #tpu.dot_dimension_numbers<[1], [0], [0], [1], [0, 0, 1, 1], [], []>} : vector<8x32xf32>, vector<32x128xf32>, vector<8x128xf32> -> vector<8x128xf32>
    %c0_3 = arith.constant 0 : index
    %c0_4 = arith.constant 0 : index
    %3 = vector.load %arg3[%c0_3, %c0_4] : memref<1x128xf32, #tpu.memory_space<vmem>>, vector<1x128xf32>
    %4 = vector.broadcast %3 : vector<1x128xf32> to vector<8x128xf32>
    %5 = arith.addf %2, %4 : vector<8x128xf32>
    %cst_5 = arith.constant 0.000000e+00 : f32
    %6 = vector.broadcast %cst_5 : f32 to vector<8x128xf32>
    %7 = arith.maximumf %5, %6 : vector<8x128xf32>
    %c0_6 = arith.constant 0 : index
    %c0_7 = arith.constant 0 : index
    %8 = vector.load %arg4[%c0_6, %c0_7] : memref<128x128xf32, #tpu.memory_space<vmem>>, vector<128x128xf32>
    %cst_8 = arith.constant dense<0.000000e+00> : vector<8x128xf32>
    %9 = tpu.matmul %7, %8, %cst_8 {dimension_numbers = #tpu.dot_dimension_numbers<[1], [0], [0], [1], [0, 0, 1, 1], [], []>} : vector<8x128xf32>, vector<128x128xf32>, vector<8x128xf32> -> vector<8x128xf32>
    %c0_9 = arith.constant 0 : index
    %c0_10 = arith.constant 0 : index
    %10 = vector.load %arg5[%c0_9, %c0_10] : memref<1x128xf32, #tpu.memory_space<vmem>>, vector<1x128xf32>
    %11 = vector.broadcast %10 : vector<1x128xf32> to vector<8x128xf32>
    %12 = arith.addf %9, %11 : vector<8x128xf32>
    %cst_11 = arith.constant 0.000000e+00 : f32
    %13 = vector.broadcast %cst_11 : f32 to vector<8x128xf32>
    %14 = arith.maximumf %12, %13 : vector<8x128xf32>
    %c0_12 = arith.constant 0 : index
    %c0_13 = arith.constant 0 : index
    %15 = vector.load %arg6[%c0_12, %c0_13] : memref<128x128xf32, #tpu.memory_space<vmem>>, vector<128x128xf32>
    %cst_14 = arith.constant dense<0.000000e+00> : vector<8x128xf32>
    %16 = tpu.matmul %14, %15, %cst_14 {dimension_numbers = #tpu.dot_dimension_numbers<[1], [0], [0], [1], [0, 0, 1, 1], [], []>} : vector<8x128xf32>, vector<128x128xf32>, vector<8x128xf32> -> vector<8x128xf32>
    %c0_15 = arith.constant 0 : index
    %c0_16 = arith.constant 0 : index
    %17 = vector.load %arg7[%c0_15, %c0_16] : memref<1x128xf32, #tpu.memory_space<vmem>>, vector<1x128xf32>
    %18 = vector.broadcast %17 : vector<1x128xf32> to vector<8x128xf32>
    %19 = arith.addf %16, %18 : vector<8x128xf32>
    %cst_17 = arith.constant 0.000000e+00 : f32
    %20 = vector.broadcast %cst_17 : f32 to vector<8x128xf32>
    %21 = arith.maximumf %19, %20 : vector<8x128xf32>
    %c0_18 = arith.constant 0 : index
    %c0_19 = arith.constant 0 : index
    %22 = vector.load %arg8[%c0_18, %c0_19] : memref<128x8xf32, #tpu.memory_space<vmem>>, vector<128x8xf32>
    %cst_20 = arith.constant dense<0.000000e+00> : vector<8x8xf32>
    %23 = tpu.matmul %21, %22, %cst_20 {dimension_numbers = #tpu.dot_dimension_numbers<[1], [0], [0], [1], [0, 0, 1, 1], [], []>} : vector<8x128xf32>, vector<128x8xf32>, vector<8x8xf32> -> vector<8x8xf32>
    %c0_21 = arith.constant 0 : index
    %c0_22 = arith.constant 0 : index
    %24 = vector.load %arg9[%c0_21, %c0_22] : memref<1x8xf32, #tpu.memory_space<vmem>>, vector<1x8xf32>
    %25 = vector.broadcast %24 : vector<1x8xf32> to vector<8x8xf32>
    %26 = arith.addf %23, %25 : vector<8x8xf32>
    %c0_23 = arith.constant 0 : index
    %c0_24 = arith.constant 0 : index
    %27 = vector.load %arg10[%c0_23, %c0_24] : memref<8x8xf32, #tpu.memory_space<vmem>>, vector<8x8xf32>
    tpu.vector_store %arg10[%c0_23, %c0_24], %26 {strides = array<i32>} : memref<8x8xf32, #tpu.memory_space<vmem>>, vector<8x8xf32>,
    return
  }
  func.func @transform_0(%arg0: i32) -> (i32, i32) {
    %c0_i32 = arith.constant 0 : i32
    %c0_i32_0 = arith.constant 0 : i32
    return %arg0, %c0_i32 : i32, i32
  }
  func.func @transform_1(%arg0: i32) -> (i32, i32) {
    %c0_i32 = arith.constant 0 : i32
    %c0_i32_0 = arith.constant 0 : i32
    %c0_i32_1 = arith.constant 0 : i32
    return %c0_i32, %c0_i32_0 : i32, i32
  }
  func.func @transform_2(%arg0: i32) -> (i32, i32) {
    %c0_i32 = arith.constant 0 : i32
    %c0_i32_0 = arith.constant 0 : i32
    %c0_i32_1 = arith.constant 0 : i32
    return %c0_i32, %c0_i32_0 : i32, i32
  }
  func.func @transform_3(%arg0: i32) -> (i32, i32) {
    %c0_i32 = arith.constant 0 : i32
    %c0_i32_0 = arith.constant 0 : i32
    %c0_i32_1 = arith.constant 0 : i32
    return %c0_i32, %c0_i32_0 : i32, i32
  }
  func.func @transform_4(%arg0: i32) -> (i32, i32) {
    %c0_i32 = arith.constant 0 : i32
    %c0_i32_0 = arith.constant 0 : i32
    %c0_i32_1 = arith.constant 0 : i32
    return %c0_i32, %c0_i32_0 : i32, i32
  }
  func.func @transform_5(%arg0: i32) -> (i32, i32) {
    %c0_i32 = arith.constant 0 : i32
    %c0_i32_0 = arith.constant 0 : i32
    %c0_i32_1 = arith.constant 0 : i32
    return %c0_i32, %c0_i32_0 : i32, i32
  }
  func.func @transform_6(%arg0: i32) -> (i32, i32) {
    %c0_i32 = arith.constant 0 : i32
    %c0_i32_0 = arith.constant 0 : i32
    %c0_i32_1 = arith.constant 0 : i32
    return %c0_i32, %c0_i32_0 : i32, i32
  }
  func.func @transform_7(%arg0: i32) -> (i32, i32) {
    %c0_i32 = arith.constant 0 : i32
    %c0_i32_0 = arith.constant 0 : i32
    %c0_i32_1 = arith.constant 0 : i32
    return %c0_i32, %c0_i32_0 : i32, i32
  }
  func.func @transform_8(%arg0: i32) -> (i32, i32) {
    %c0_i32 = arith.constant 0 : i32
    %c0_i32_0 = arith.constant 0 : i32
    %c0_i32_1 = arith.constant 0 : i32
    return %c0_i32, %c0_i32_0 : i32, i32
  }
  func.func @transform_9(%arg0: i32) -> (i32, i32) {
    %c0_i32 = arith.constant 0 : i32
    %c0_i32_0 = arith.constant 0 : i32
    return %arg0, %c0_i32 : i32, i32
  }
}

</mosaic_0001>

<llo_original>
// kernel: mlp_forward.1
$region0: #{mlp_forward.1}
  #allocation0 [shape = 'u32[]', space=smem, size = 0x4, offset = 0x4, fixed_abs, tag = 'smem constant byte address 0x4 - core index']
  #allocation1 [shape = 'u32[144,128]{1,0:T(1,128)}', space=vmem, size = 0x12000, scoped, tag = 'internal scratch']
  %s0 = inlined_call_operand.vmem [shape: f32[8,32], index: 0, kind: input, shape index: {}]
  %s1 = inlined_call_operand.hbm [shape: f32[32,128], index: 1, kind: input, shape index: {}]
  %s2 = inlined_call_operand.vmem [shape: f32[1,128], index: 2, kind: input, shape index: {}]
  %s3 = inlined_call_operand.vmem [shape: f32[128,128], index: 3, kind: input, shape index: {}]
  %s4 = inlined_call_operand.vmem [shape: f32[1,128], index: 4, kind: input, shape index: {}]
  %s5 = inlined_call_operand.hbm [shape: f32[128,128], index: 5, kind: input, shape index: {}]
  %s6 = inlined_call_operand.vmem [shape: f32[1,128], index: 6, kind: input, shape index: {}]
  %s7 = inlined_call_operand.vmem [shape: f32[128,8], index: 7, kind: input, shape index: {}]
  %s8 = inlined_call_operand.vmem [shape: f32[1,8], index: 8, kind: input, shape index: {}]
  %s9 = inlined_call_operand.vmem [shape: f32[8,8], index: 9, kind: output, shape index: {}]
  %s10 = sld [smem:[#allocation0]]
  $region54: #{mlp_forward.1} parent=0
    _
  %s12 = ssub.s32 1, %s10
  %s13 = scalar_select 0, %s12, %s10
  $region1: #{mlp_forward.1} parent=0
    #allocation2 [shape = 'u8[16384]{0}', space=vmem, size = 0x4000, scoped, tag = 'input window, operand 1, single buffered']
    #allocation3 [shape = 's32[1]{0}', space=sflag, size = 0x4, scoped, tag = 'scoped memory for mlp_forward.1']
    #allocation4 [shape = 'u8[65536]{0}', space=vmem, size = 0x10000, scoped, tag = 'input window, operand 5, single buffered']
    #allocation5 [shape = 's32[1]{0}', space=sflag, size = 0x4, scoped, tag = 'scoped memory for mlp_forward.1']
    %14 = vsyncpa [#allocation3], 0
    %15 = vsyncpa [#allocation5], 0
    // Predicated region
    $region2: #{mlp_forward.1} parent=1 // pred_check
      _
    $region3: #{mlp_forward.1} parent=1 // pred_check_branch
      %17 = sbr.rel (0) target = $region5
    $region4: #{mlp_forward.1} parent=1 // pred_region
      _
    $region5: #{mlp_forward.1} parent=1 // pred_fallthru
      _
    // Predicated region
    $region6: #{mlp_forward.1} parent=1 // pred_check
      _
    $region7: #{mlp_forward.1} parent=1 // pred_check_branch
      %19 = sbr.rel (0) target = $region9
    $region8: #{mlp_forward.1} parent=1 // pred_region
      %s21 = ssub.s32 512, 512
      %22 = vsyncadd [#allocation3], %s21
      %s23 = sshll.u32 [#allocation2], 4
      %s24 = int_to_ptr.vmem [resolvable:$true] %s23
      %29 = dma.hbm_to_vmem [thread:$0]  %s1, 512, %s24, [#allocation3], 128, 128, 8
    $region9: #{mlp_forward.1} parent=1 // pred_fallthru
      _
    // Predicated region
    $region10: #{mlp_forward.1} parent=1 // pred_check
      _
    $region11: #{mlp_forward.1} parent=1 // pred_check_branch
      %31 = sbr.rel (0) target = $region13
    $region12: #{mlp_forward.1} parent=1 // pred_region
      _
    $region13: #{mlp_forward.1} parent=1 // pred_fallthru
      _
    // Predicated region
    $region14: #{mlp_forward.1} parent=1 // pred_check
      _
    $region15: #{mlp_forward.1} parent=1 // pred_check_branch
      %33 = sbr.rel (0) target = $region17
    $region16: #{mlp_forward.1} parent=1 // pred_region
      _
    $region17: #{mlp_forward.1} parent=1 // pred_fallthru
      _
    // Predicated region
    $region18: #{mlp_forward.1} parent=1 // pred_check
      _
    $region19: #{mlp_forward.1} parent=1 // pred_check_branch
      %35 = sbr.rel (0) target = $region21
    $region20: #{mlp_forward.1} parent=1 // pred_region
      _
    $region21: #{mlp_forward.1} parent=1 // pred_fallthru
      _
    // Predicated region
    $region22: #{mlp_forward.1} parent=1 // pred_check
      _
    $region23: #{mlp_forward.1} parent=1 // pred_check_branch
      %37 = sbr.rel (0) target = $region25
    $region24: #{mlp_forward.1} parent=1 // pred_region
      %s39 = ssub.s32 2048, 2048
      %40 = vsyncadd [#allocation5], %s39
      %s41 = sshll.u32 [#allocation4], 4
      %s42 = int_to_ptr.vmem [resolvable:$true] %s41
      %47 = dma.hbm_to_vmem [thread:$0]  %s5, 2048, %s42, [#allocation5], 128, 128, 8
    $region25: #{mlp_forward.1} parent=1 // pred_fallthru
      _
    // Predicated region
    $region26: #{mlp_forward.1} parent=1 // pred_check
      _
    $region27: #{mlp_forward.1} parent=1 // pred_check_branch
      %49 = sbr.rel (0) target = $region29
    $region28: #{mlp_forward.1} parent=1 // pred_region
      _
    $region29: #{mlp_forward.1} parent=1 // pred_fallthru
      _
    // Predicated region
    $region30: #{mlp_forward.1} parent=1 // pred_check
      _
    $region31: #{mlp_forward.1} parent=1 // pred_check_branch
      %51 = sbr.rel (0) target = $region33
    $region32: #{mlp_forward.1} parent=1 // pred_region
      _
    $region33: #{mlp_forward.1} parent=1 // pred_fallthru
      _
    // Predicated region
    $region34: #{mlp_forward.1} parent=1 // pred_check
      _
    $region35: #{mlp_forward.1} parent=1 // pred_check_branch
      %53 = sbr.rel (0) target = $region37
    $region36: #{mlp_forward.1} parent=1 // pred_region
      _
    $region37: #{mlp_forward.1} parent=1 // pred_fallthru
      _
    // Predicated region
    $region38: #{mlp_forward.1} parent=1 // pred_check
      _
    $region39: #{mlp_forward.1} parent=1 // pred_check_branch
      %55 = sbr.rel (0) target = $region41
    $region40: #{mlp_forward.1} parent=1 // pred_region
      %56 = dma.done [#allocation3], 512
    $region41: #{mlp_forward.1} parent=1 // pred_fallthru
      _
    // Predicated region
    $region42: #{mlp_forward.1} parent=1 // pred_check
      _
    $region43: #{mlp_forward.1} parent=1 // pred_check_branch
      %58 = sbr.rel (0) target = $region45
    $region44: #{mlp_forward.1} parent=1 // pred_region
      %59 = dma.done [#allocation5], 2048
    $region45: #{mlp_forward.1} parent=1 // pred_fallthru
      _
    %v60 = vld [vmem:[%s0] sm:$0xff]
    %v61 = vld [vmem:[#allocation2] sm:$0xff]
    %v62 = vld [vmem:[#allocation2 + $0x8] sm:$0xff]
    %v63 = vld [vmem:[#allocation2 + $0x10] sm:$0xff]
    %v64 = vld [vmem:[#allocation2 + $0x18] sm:$0xff]
    %v65 = vld [vmem:[%s2] sm:$0x1]
    %v67 = vlaneseq
    %v68 = vshrl.u32 %v67, 7
    %v69 = vsub.s32 0, %v68
    %v70 = vrot.slane %v65, %v69
    %vm72 = vcmask 261120
    %v74 = vsel %vm72, %v60, 0
    %76 = vmatprep.subr.mxu0 0.0
    %77 = vmatpush1.msra.mxu0 %v61
    %78 = vmatprep.subr.mxu0 0.0
    %79 = vmatpush1.msra.mxu0 %v62
    %80 = vmatprep.subr.mxu0 0.0
    %81 = vmatpush1.msra.mxu0 %v63
    %82 = vmatprep.subr.mxu0 0.0
    %83 = vmatpush1.msra.mxu0 %v64
    %84 = vmatprep.subr.mxu0 0.0
    %85 = vmatpush1.msra.mxu0 0.0
    %86 = vmatprep.subr.mxu0 0.0
    %87 = vmatpush1.msra.mxu0 0.0
    %88 = vmatprep.subr.mxu0 0.0
    %89 = vmatpush1.msra.mxu0 0.0
    %90 = vmatprep.subr.mxu0 0.0
    %91 = vmatpush1.msra.mxu0 0.0
    %92 = vmatprep.subr.mxu0 0.0
    %93 = vmatpush1.msra.mxu0 0.0
    %94 = vmatprep.subr.mxu0 0.0
    %95 = vmatpush1.msra.mxu0 0.0
    %96 = vmatprep.subr.mxu0 0.0
    %97 = vmatpush1.msra.mxu0 0.0
    %98 = vmatprep.subr.mxu0 0.0
    %99 = vmatpush1.msra.mxu0 0.0
    %100 = vmatprep.subr.mxu0 0.0
    %101 = vmatpush1.msra.mxu0 0.0
    %102 = vmatprep.subr.mxu0 0.0
    %103 = vmatpush1.msra.mxu0 0.0
    %104 = vmatprep.subr.mxu0 0.0
    %105 = vmatpush1.msra.mxu0 0.0
    %106 = vmatprep.subr.mxu0 0.0
    %107 = vmatpush1.msra.mxu0 0.0
    %108 = vmatprep.subr.mxu0 0.0
    %109 = vmatpush1.msra.mxu0 0.0
    %110 = vmatprep.subr.mxu0 0.0
    %111 = vmatpush1.msra.mxu0 0.0
    %112 = vmatprep.subr.mxu0 0.0
    %113 = vmatpush1.msra.mxu0 0.0
    %114 = vmatprep.subr.mxu0 0.0
    %115 = vmatpush1.msra.mxu0 0.0
    %116 = vmatprep.subr.mxu0 0.0
    %117 = vmatpush1.msra.mxu0 0.0
    %118 = vmatprep.subr.mxu0 0.0
    %119 = vmatpush1.msra.mxu0 0.0
    %120 = vmatprep.subr.mxu0 0.0
    %121 = vmatpush1.msra.mxu0 0.0
    %122 = vmatprep.subr.mxu0 0.0
    %123 = vmatpush1.msra.mxu0 0.0
    %124 = vmatprep.subr.mxu0 0.0
    %125 = vmatpush1.msra.mxu0 0.0
    %126 = vmatprep.subr.mxu0 0.0
    %127 = vmatpush1.msra.mxu0 0.0
    %128 = vmatprep.subr.mxu0 0.0
    %129 = vmatpush1.msra.mxu0 0.0
    %130 = vmatprep.subr.mxu0 0.0
    %131 = vmatpush1.msra.mxu0 0.0
    %132 = vmatprep.subr.mxu0 0.0
    %133 = vmatpush1.msra.mxu0 0.0
    %134 = vmatprep.subr.mxu0 0.0
    %135 = vmatpush1.msra.mxu0 0.0
    %136 = vmatprep.subr.mxu0 0.0
    %137 = vmatpush1.msra.mxu0 0.0
    %138 = vmatprep.subr.mxu0 0.0
    %139 = vmatpush1.msra.mxu0 0.0
    %140 = vmatprep.mubr.f32.mxu0 0.0
    %141 = vmatmul.mubr.f32.gmra.mrb[0].mxu0 %v74
    %v142 = vpop.f32.mrb[0].mxu0
    %v143 = vadd.f32 %v70, %v142
    %v144 = vpop.f32.mrb[0].mxu0
    %145 = vdwg.mxu0
    %v146 = vmax.f32 %v143, 0.0
    %v147 = vld [vmem:[%s3] sm:$0xff]
    %v148 = vld [vmem:[%s3 + $0x8] sm:$0xff]
    %v149 = vld [vmem:[%s3 + $0x10] sm:$0xff]
    %v150 = vld [vmem:[%s3 + $0x18] sm:$0xff]
    %v151 = vld [vmem:[%s3 + $0x20] sm:$0xff]
    %v152 = vld [vmem:[%s3 + $0x28] sm:$0xff]
    %v153 = vld [vmem:[%s3 + $0x30] sm:$0xff]
    %v154 = vld [vmem:[%s3 + $0x38] sm:$0xff]
    %v155 = vld [vmem:[%s3 + $0x40] sm:$0xff]
    %v156 = vld [vmem:[%s3 + $0x48] sm:$0xff]
    %v157 = vld [vmem:[%s3 + $0x50] sm:$0xff]
    %v158 = vld [vmem:[%s3 + $0x58] sm:$0xff]
    %v159 = vld [vmem:[%s3 + $0x60] sm:$0xff]
    %v160 = vld [vmem:[%s3 + $0x68] sm:$0xff]
    %v161 = vld [vmem:[%s3 + $0x70] sm:$0xff]
    %v162 = vld [vmem:[%s3 + $0x78] sm:$0xff]
    %v163 = vld [vmem:[%s4] sm:$0x1]
    %v165 = vlaneseq
    %v166 = vshrl.u32 %v165, 7
    %v167 = vsub.s32 0, %v166
    %v168 = vrot.slane %v163, %v167
    %170 = vmatprep.subr.mxu0 0.0
    %171 = vmatpush1.msra.mxu0 %v147
    %172 = vmatprep.subr.mxu0 0.0
    %173 = vmatpush1.msra.mxu0 %v148
    %174 = vmatprep.subr.mxu0 0.0
    %175 = vmatpush1.msra.mxu0 %v149
    %176 = vmatprep.subr.mxu0 0.0
    %177 = vmatpush1.msra.mxu0 %v150
    %178 = vmatprep.subr.mxu0 0.0
    %179 = vmatpush1.msra.mxu0 %v151
    %180 = vmatprep.subr.mxu0 0.0
    %181 = vmatpush1.msra.mxu0 %v152
    %182 = vmatprep.subr.mxu0 0.0
    %183 = vmatpush1.msra.mxu0 %v153
    %184 = vmatprep.subr.mxu0 0.0
    %185 = vmatpush1.msra.mxu0 %v154
    %186 = vmatprep.subr.mxu0 0.0
    %187 = vmatpush1.msra.mxu0 %v155
    %188 = vmatprep.subr.mxu0 0.0
    %189 = vmatpush1.msra.mxu0 %v156
    %190 = vmatprep.subr.mxu0 0.0
    %191 = vmatpush1.msra.mxu0 %v157
    %192 = vmatprep.subr.mxu0 0.0
    %193 = vmatpush1.msra.mxu0 %v158
    %194 = vmatprep.subr.mxu0 0.0
    %195 = vmatpush1.msra.mxu0 %v159
    %196 = vmatprep.subr.mxu0 0.0
    %197 = vmatpush1.msra.mxu0 %v160
    %198 = vmatprep.subr.mxu0 0.0
    %199 = vmatpush1.msra.mxu0 %v161
    %200 = vmatprep.subr.mxu0 0.0
    %201 = vmatpush1.msra.mxu0 %v162
    %202 = vmatprep.subr.mxu0 0.0
    %203 = vmatpush1.msra.mxu0 0.0
    %204 = vmatprep.subr.mxu0 0.0
    %205 = vmatpush1.msra.mxu0 0.0
    %206 = vmatprep.subr.mxu0 0.0
    %207 = vmatpush1.msra.mxu0 0.0
    %208 = vmatprep.subr.mxu0 0.0
    %209 = vmatpush1.msra.mxu0 0.0
    %210 = vmatprep.subr.mxu0 0.0
    %211 = vmatpush1.msra.mxu0 0.0
    %212 = vmatprep.subr.mxu0 0.0
    %213 = vmatpush1.msra.mxu0 0.0
    %214 = vmatprep.subr.mxu0 0.0
    %215 = vmatpush1.msra.mxu0 0.0
    %216 = vmatprep.subr.mxu0 0.0
    %217 = vmatpush1.msra.mxu0 0.0
    %218 = vmatprep.subr.mxu0 0.0
    %219 = vmatpush1.msra.mxu0 0.0
    %220 = vmatprep.subr.mxu0 0.0
    %221 = vmatpush1.msra.mxu0 0.0
    %222 = vmatprep.subr.mxu0 0.0
    %223 = vmatpush1.msra.mxu0 0.0
    %224 = vmatprep.subr.mxu0 0.0
    %225 = vmatpush1.msra.mxu0 0.0
    %226 = vmatprep.subr.mxu0 0.0
    %227 = vmatpush1.msra.mxu0 0.0
    %228 = vmatprep.subr.mxu0 0.0
    %229 = vmatpush1.msra.mxu0 0.0
    %230 = vmatprep.subr.mxu0 0.0
    %231 = vmatpush1.msra.mxu0 0.0
    %232 = vmatprep.subr.mxu0 0.0
    %233 = vmatpush1.msra.mxu0 0.0
    %234 = vmatprep.mubr.f32.mxu0 0.0
    %235 = vmatmul.mubr.f32.gmra.mrb[0].mxu0 %v146
    %v236 = vpop.f32.mrb[0].mxu0
    %v237 = vadd.f32 %v168, %v236
    %v238 = vpop.f32.mrb[0].mxu0
    %239 = vdwg.mxu0
    %v240 = vmax.f32 %v237, 0.0
    %v241 = vld [vmem:[#allocation4] sm:$0xff]
    %v242 = vld [vmem:[#allocation4 + $0x8] sm:$0xff]
    %v243 = vld [vmem:[#allocation4 + $0x10] sm:$0xff]
    %v244 = vld [vmem:[#allocation4 + $0x18] sm:$0xff]
    %v245 = vld [vmem:[#allocation4 + $0x20] sm:$0xff]
    %v246 = vld [vmem:[#allocation4 + $0x28] sm:$0xff]
    %v247 = vld [vmem:[#allocation4 + $0x30] sm:$0xff]
    %v248 = vld [vmem:[#allocation4 + $0x38] sm:$0xff]
    %v249 = vld [vmem:[#allocation4 + $0x40] sm:$0xff]
    %v250 = vld [vmem:[#allocation4 + $0x48] sm:$0xff]
    %v251 = vld [vmem:[#allocation4 + $0x50] sm:$0xff]
    %v252 = vld [vmem:[#allocation4 + $0x58] sm:$0xff]
    %v253 = vld [vmem:[#allocation4 + $0x60] sm:$0xff]
    %v254 = vld [vmem:[#allocation4 + $0x68] sm:$0xff]
    %v255 = vld [vmem:[#allocation4 + $0x70] sm:$0xff]
    %v256 = vld [vmem:[#allocation4 + $0x78] sm:$0xff]
    %v257 = vld [vmem:[%s6] sm:$0x1]
    %v259 = vlaneseq
    %v260 = vshrl.u32 %v259, 7
    %v261 = vsub.s32 0, %v260
    %v262 = vrot.slane %v257, %v261
    %264 = vmatprep.subr.mxu0 0.0
    %265 = vmatpush1.msra.mxu0 %v241
    %266 = vmatprep.subr.mxu0 0.0
    %267 = vmatpush1.msra.mxu0 %v242
    %268 = vmatprep.subr.mxu0 0.0
    %269 = vmatpush1.msra.mxu0 %v243
    %270 = vmatprep.subr.mxu0 0.0
    %271 = vmatpush1.msra.mxu0 %v244
    %272 = vmatprep.subr.mxu0 0.0
    %273 = vmatpush1.msra.mxu0 %v245
    %274 = vmatprep.subr.mxu0 0.0
    %275 = vmatpush1.msra.mxu0 %v246
    %276 = vmatprep.subr.mxu0 0.0
    %277 = vmatpush1.msra.mxu0 %v247
    %278 = vmatprep.subr.mxu0 0.0
    %279 = vmatpush1.msra.mxu0 %v248
    %280 = vmatprep.subr.mxu0 0.0
    %281 = vmatpush1.msra.mxu0 %v249
    %282 = vmatprep.subr.mxu0 0.0
    %283 = vmatpush1.msra.mxu0 %v250
    %284 = vmatprep.subr.mxu0 0.0
    %285 = vmatpush1.msra.mxu0 %v251
    %286 = vmatprep.subr.mxu0 0.0
    %287 = vmatpush1.msra.mxu0 %v252
    %288 = vmatprep.subr.mxu0 0.0
    %289 = vmatpush1.msra.mxu0 %v253
    %290 = vmatprep.subr.mxu0 0.0
    %291 = vmatpush1.msra.mxu0 %v254
    %292 = vmatprep.subr.mxu0 0.0
    %293 = vmatpush1.msra.mxu0 %v255
    %294 = vmatprep.subr.mxu0 0.0
    %295 = vmatpush1.msra.mxu0 %v256
    %296 = vmatprep.subr.mxu0 0.0
    %297 = vmatpush1.msra.mxu0 0.0
    %298 = vmatprep.subr.mxu0 0.0
    %299 = vmatpush1.msra.mxu0 0.0
    %300 = vmatprep.subr.mxu0 0.0
    %301 = vmatpush1.msra.mxu0 0.0
    %302 = vmatprep.subr.mxu0 0.0
    %303 = vmatpush1.msra.mxu0 0.0
    %304 = vmatprep.subr.mxu0 0.0
    %305 = vmatpush1.msra.mxu0 0.0
    %306 = vmatprep.subr.mxu0 0.0
    %307 = vmatpush1.msra.mxu0 0.0
    %308 = vmatprep.subr.mxu0 0.0
    %309 = vmatpush1.msra.mxu0 0.0
    %310 = vmatprep.subr.mxu0 0.0
    %311 = vmatpush1.msra.mxu0 0.0
    %312 = vmatprep.subr.mxu0 0.0
    %313 = vmatpush1.msra.mxu0 0.0
    %314 = vmatprep.subr.mxu0 0.0
    %315 = vmatpush1.msra.mxu0 0.0
    %316 = vmatprep.subr.mxu0 0.0
    %317 = vmatpush1.msra.mxu0 0.0
    %318 = vmatprep.subr.mxu0 0.0
    %319 = vmatpush1.msra.mxu0 0.0
    %320 = vmatprep.subr.mxu0 0.0
    %321 = vmatpush1.msra.mxu0 0.0
    %322 = vmatprep.subr.mxu0 0.0
    %323 = vmatpush1.msra.mxu0 0.0
    %324 = vmatprep.subr.mxu0 0.0
    %325 = vmatpush1.msra.mxu0 0.0
    %326 = vmatprep.subr.mxu0 0.0
    %327 = vmatpush1.msra.mxu0 0.0
    %328 = vmatprep.mubr.f32.mxu0 0.0
    %329 = vmatmul.mubr.f32.gmra.mrb[0].mxu0 %v240
    %v330 = vpop.f32.mrb[0].mxu0
    %v331 = vadd.f32 %v262, %v330
    %v332 = vpop.f32.mrb[0].mxu0
    %333 = vdwg.mxu0
    %v334 = vmax.f32 %v331, 0.0
    %v335 = vld [vmem:[%s7] sm:$0xff]
    %v336 = vld [vmem:[%s7 + $0x8] sm:$0xff]
    %v337 = vld [vmem:[%s7 + $0x10] sm:$0xff]
    %v338 = vld [vmem:[%s7 + $0x18] sm:$0xff]
    %v339 = vld [vmem:[%s7 + $0x20] sm:$0xff]
    %v340 = vld [vmem:[%s7 + $0x28] sm:$0xff]
    %v341 = vld [vmem:[%s7 + $0x30] sm:$0xff]
    %v342 = vld [vmem:[%s7 + $0x38] sm:$0xff]
    %v343 = vld [vmem:[%s7 + $0x40] sm:$0xff]
    %v344 = vld [vmem:[%s7 + $0x48] sm:$0xff]
    %v345 = vld [vmem:[%s7 + $0x50] sm:$0xff]
    %v346 = vld [vmem:[%s7 + $0x58] sm:$0xff]
    %v347 = vld [vmem:[%s7 + $0x60] sm:$0xff]
    %v348 = vld [vmem:[%s7 + $0x68] sm:$0xff]
    %v349 = vld [vmem:[%s7 + $0x70] sm:$0xff]
    %v350 = vld [vmem:[%s7 + $0x78] sm:$0xff]
    %v351 = vld [vmem:[%s8] sm:$0x1]
    %v353 = vlaneseq
    %v354 = vshrl.u32 %v353, 7
    %v355 = vsub.s32 0, %v354
    %v356 = vrot.slane %v351, %v355
    %358 = vmatprep.subr.mxu0 0.0
    %359 = vmatpush1.msra.mxu0 %v335
    %360 = vmatprep.subr.mxu0 0.0
    %361 = vmatpush1.msra.mxu0 %v336
    %362 = vmatprep.subr.mxu0 0.0
    %363 = vmatpush1.msra.mxu0 %v337
    %364 = vmatprep.subr.mxu0 0.0
    %365 = vmatpush1.msra.mxu0 %v338
    %366 = vmatprep.subr.mxu0 0.0
    %367 = vmatpush1.msra.mxu0 %v339
    %368 = vmatprep.subr.mxu0 0.0
    %369 = vmatpush1.msra.mxu0 %v340
    %370 = vmatprep.subr.mxu0 0.0
    %371 = vmatpush1.msra.mxu0 %v341
    %372 = vmatprep.subr.mxu0 0.0
    %373 = vmatpush1.msra.mxu0 %v342
    %374 = vmatprep.subr.mxu0 0.0
    %375 = vmatpush1.msra.mxu0 %v343
    %376 = vmatprep.subr.mxu0 0.0
    %377 = vmatpush1.msra.mxu0 %v344
    %378 = vmatprep.subr.mxu0 0.0
    %379 = vmatpush1.msra.mxu0 %v345
    %380 = vmatprep.subr.mxu0 0.0
    %381 = vmatpush1.msra.mxu0 %v346
    %382 = vmatprep.subr.mxu0 0.0
    %383 = vmatpush1.msra.mxu0 %v347
    %384 = vmatprep.subr.mxu0 0.0
    %385 = vmatpush1.msra.mxu0 %v348
    %386 = vmatprep.subr.mxu0 0.0
    %387 = vmatpush1.msra.mxu0 %v349
    %388 = vmatprep.subr.mxu0 0.0
    %389 = vmatpush1.msra.mxu0 %v350
    %390 = vmatprep.subr.mxu0 0.0
    %391 = vmatpush1.msra.mxu0 0.0
    %392 = vmatprep.subr.mxu0 0.0
    %393 = vmatpush1.msra.mxu0 0.0
    %394 = vmatprep.subr.mxu0 0.0
    %395 = vmatpush1.msra.mxu0 0.0
    %396 = vmatprep.subr.mxu0 0.0
    %397 = vmatpush1.msra.mxu0 0.0
    %398 = vmatprep.subr.mxu0 0.0
    %399 = vmatpush1.msra.mxu0 0.0
    %400 = vmatprep.subr.mxu0 0.0
    %401 = vmatpush1.msra.mxu0 0.0
    %402 = vmatprep.subr.mxu0 0.0
    %403 = vmatpush1.msra.mxu0 0.0
    %404 = vmatprep.subr.mxu0 0.0
    %405 = vmatpush1.msra.mxu0 0.0
    %406 = vmatprep.subr.mxu0 0.0
    %407 = vmatpush1.msra.mxu0 0.0
    %408 = vmatprep.subr.mxu0 0.0
    %409 = vmatpush1.msra.mxu0 0.0
    %410 = vmatprep.subr.mxu0 0.0
    %411 = vmatpush1.msra.mxu0 0.0
    %412 = vmatprep.subr.mxu0 0.0
    %413 = vmatpush1.msra.mxu0 0.0
    %414 = vmatprep.subr.mxu0 0.0
    %415 = vmatpush1.msra.mxu0 0.0
    %416 = vmatprep.subr.mxu0 0.0
    %417 = vmatpush1.msra.mxu0 0.0
    %418 = vmatprep.subr.mxu0 0.0
    %419 = vmatpush1.msra.mxu0 0.0
    %420 = vmatprep.subr.mxu0 0.0
    %421 = vmatpush1.msra.mxu0 0.0
    %422 = vmatprep.mubr.f32.mxu0 0.0
    %423 = vmatmul.mubr.f32.gmra.mrb[0].mxu0 %v334
    %v424 = vpop.f32.mrb[0].mxu0
    %v425 = vadd.f32 %v356, %v424
    %v426 = vpop.f32.mrb[0].mxu0
    %427 = vdwg.mxu0
    %vm428 = vcmask 64512
    %429 = vst.msk [vmem:[%s9] sm:$0xff] %vm428, %v425
    // Predicated region
    $region46: #{mlp_forward.1} parent=1 // pred_check
      _
    $region47: #{mlp_forward.1} parent=1 // pred_check_branch
      %431 = sbr.rel (0) target = $region49
    $region48: #{mlp_forward.1} parent=1 // pred_region
      _
    $region49: #{mlp_forward.1} parent=1 // pred_fallthru
      _
    // Predicated region
    $region50: #{mlp_forward.1} parent=1 // pred_check
      _
    $region51: #{mlp_forward.1} parent=1 // pred_check_branch
      %433 = sbr.rel (0) target = $region53
    $region52: #{mlp_forward.1} parent=1 // pred_region
      _
    $region53: #{mlp_forward.1} parent=1 // pred_fallthru
      _
    %434 = vsyncpa [#allocation3], 1
    %435 = vsyncpa [#allocation5], 1

</llo_original>
